<compile_context>
chip_gen: v6e
topology: v6e:2x2x1
jax: 0.10.0
libtpu: 0.0.40
codegen_flags: <defaults>
</compile_context>

<pallas_src>
import functools

import jax
import jax.numpy as jnp
from jax import lax
from jax.experimental import pallas as pl
from jax.experimental.pallas import tpu as pltpu


def _ffn_kernel(seed_ref, x_ref, w1_ref, b1_ref, w2_ref, b2_ref, o_ref, acc_ref,
                *, dropout_rate: float, apply_dropout: bool,
                tile_m: int, tile_h: int, hidden_dim: int):
    i = pl.program_id(0)   # row-tile index     (parallel)
    j = pl.program_id(1)   # hidden-tile index  (reduction)

    @pl.when(j == 0)
    def _():
        acc_ref[...] = jnp.zeros_like(acc_ref)

    # fc1 tile + bias + ReLU (f32 accumulation on the MXU).
    h = jnp.dot(x_ref[...], w1_ref[...], preferred_element_type=jnp.float32)
    h = jnp.maximum(h + b1_ref[...].astype(jnp.float32), 0.0)

    # Inverted dropout (training mode only; statically specialized out otherwise).
    if apply_dropout and dropout_rate > 0.0:
        # Global (row, col) coordinates -> stream is independent of the tiling.
        row = (lax.broadcasted_iota(jnp.int32, h.shape, 0) + i * tile_m).astype(jnp.uint32)
        col = (lax.broadcasted_iota(jnp.int32, h.shape, 1) + j * tile_h).astype(jnp.uint32)
        z = row * jnp.uint32(hidden_dim) + col
        z = z + seed_ref[0].astype(jnp.uint32) * jnp.uint32(0x9E3779B1)
        # murmur3 finalizer (fmix32) — cheap VPU-only integer mixing.
        z = (z ^ (z >> 16)) * jnp.uint32(0x85EBCA6B)
        z = (z ^ (z >> 13)) * jnp.uint32(0xC2B2AE35)
        z = z ^ (z >> 16)
        # Uniform 31-bit value; integer threshold compare (no float conversion).
        r = (z & jnp.uint32(0x7FFFFFFF)).astype(jnp.int32)
        thresh = jnp.int32(int(dropout_rate * float(1 << 31)))
        keep = r >= thresh                                   # P(keep) = 1 - rate
        h = jnp.where(keep, h * (1.0 / (1.0 - dropout_rate)), 0.0)

    # fc2 partial product for this hidden tile, accumulated in f32 scratch.
    if w2_ref.dtype != jnp.float32:
        h = h.astype(w2_ref.dtype)     # bf16 weights -> bf16 MXU matmul
    acc_ref[...] += jnp.dot(h, w2_ref[...], preferred_element_type=jnp.float32)

    @pl.when(j == pl.num_programs(1) - 1)
    def _():
        o_ref[...] = (acc_ref[...] + b2_ref[...].astype(jnp.float32)).astype(o_ref.dtype)


def _pick_tile(n: int, want: int, align: int) -> int:
    """Largest divisor of n that is <= want and a multiple of `align` (or n itself)."""
    want = min(want, n)
    for t in range(want, 0, -1):
        if n % t == 0 and (t % align == 0 or t == n):
            return t
    return n


def feed_forward(x, w1, b1, w2, b2, *, dropout_rate=0.1, training=True, seed=0,
                 tile_m=256, tile_h=512):
    """x: [B, S, E].  w1: [E, H], b1: [H], w2: [H, E], b2: [E] (pre-transposed)."""
    B, S, E = x.shape
    Ew, H = w1.shape
    assert Ew == E and w2.shape == (H, E) and b1.shape == (H,) and b2.shape == (E,)
    M = B * S

    tile_m = _pick_tile(M, tile_m, 8)     # sublane-aligned row tile
    tile_h = _pick_tile(H, tile_h, 128)   # lane-aligned hidden tile

    x2d = x.reshape(M, E)
    b1_2d = b1.reshape(1, H)
    b2_2d = b2.reshape(1, E)
    seed_arr = jnp.array([seed], dtype=jnp.int32)

    kernel = functools.partial(
        _ffn_kernel,
        dropout_rate=float(dropout_rate),
        apply_dropout=bool(training),
        tile_m=tile_m, tile_h=tile_h, hidden_dim=H)

    cost = pl.CostEstimate(
        flops=4 * M * E * H,   # two matmuls, 2*M*E*H flops each
        transcendentals=0,
        bytes_accessed=(x2d.size * x2d.dtype.itemsize
                        + w1.size * w1.dtype.itemsize
                        + w2.size * w2.dtype.itemsize
                        + b1.size * b1.dtype.itemsize
                        + b2.size * b2.dtype.itemsize
                        + M * E * x.dtype.itemsize))

    # VMEM budget: double-buffered input tiles + output tile + f32 accumulator.
    a_sz = x.dtype.itemsize
    w_sz = w1.dtype.itemsize
    vmem_needed = (2 * (tile_m * E * a_sz          # x tile
                        + E * tile_h * w_sz        # W1 tile
                        + tile_h * w_sz            # b1 tile
                        + tile_h * E * w_sz        # W2 tile
                        + E * w_sz)                # b2
                   + 2 * tile_m * E * a_sz         # output tile
                   + tile_m * E * 4)               # accumulator scratch
    vmem_limit = int(min(max(2 * vmem_needed, 32 * 1024 * 1024), 56 * 1024 * 1024))

    grid = (M // tile_m, H // tile_h)

    out2d = pl.pallas_call(
        kernel,
        out_shape=jax.ShapeDtypeStruct((M, E), x.dtype),
        grid_spec=pltpu.PrefetchScalarGridSpec(
            num_scalar_prefetch=1,
            grid=grid,
            in_specs=[
                pl.BlockSpec((tile_m, E), lambda i, j, seed: (i, 0)),   # x row tile
                pl.BlockSpec((E, tile_h), lambda i, j, seed: (0, j)),   # W1 column tile
                pl.BlockSpec((1, tile_h), lambda i, j, seed: (0, j)),   # b1 tile
                pl.BlockSpec((tile_h, E), lambda i, j, seed: (j, 0)),   # W2 row tile
                pl.BlockSpec((1, E), lambda i, j, seed: (0, 0)),        # b2
            ],
            out_specs=pl.BlockSpec((tile_m, E), lambda i, j, seed: (i, 0)),
            scratch_shapes=[pltpu.VMEM((tile_m, E), jnp.float32)],
        ),
        compiler_params=pltpu.CompilerParams(
            dimension_semantics=("parallel", "arbitrary"),
            vmem_limit_bytes=vmem_limit),
        cost_estimate=cost,
    )(seed_arr, x2d, w1, b1_2d, w2, b2_2d)

    return out2d.reshape(B, S, E)


def init_params(key, num_embeddings, hidden_layer_dim):
    """Deterministic init mimicking nn.Linear's default U(-1/sqrt(fan_in), +...)."""
    k1, k2, k3, k4 = jax.random.split(key, 4)
    bound1 = 1.0 / (num_embeddings ** 0.5)
    bound2 = 1.0 / (hidden_layer_dim ** 0.5)
    # stored transposed: [in_dim, out_dim]
    w1 = jax.random.uniform(k1, (num_embeddings, hidden_layer_dim),
                            jnp.float32, -bound1, bound1)
    b1 = jax.random.uniform(k2, (hidden_layer_dim,), jnp.float32, -bound1, bound1)
    w2 = jax.random.uniform(k3, (hidden_layer_dim, num_embeddings),
                            jnp.float32, -bound2, bound2)
    b2 = jax.random.uniform(k4, (num_embeddings,), jnp.float32, -bound2, bound2)
    return w1, b1, w2, b2


if __name__ == "__main__":
    # Small shapes consistent with the module (hidden = 4 * embed), but lane-dense
    # (E multiple of 128) so stores are unmasked.
    B, S, E = 2, 128, 128
    H = 4 * E
    dropout_rate = 0.1

    key = jax.random.PRNGKey(0)
    kx, kp = jax.random.split(key)
    x = jax.random.normal(kx, (B, S, E), dtype=jnp.float32)
    w1, b1, w2, b2 = init_params(kp, E, H)

    # Use smaller-than-default tiles here so the demo exercises both grid axes
    # (2 row tiles x 2 hidden tiles); production defaults are tile_m=256, tile_h=512.
    out_eval = feed_forward(x, w1, b1, w2, b2, dropout_rate=dropout_rate,
                            training=False, tile_m=128, tile_h=256)
    out_eval = jax.block_until_ready(out_eval)

    ref = (jnp.maximum(x.reshape(-1, E) @ w1 + b1, 0.0) @ w2 + b2).reshape(B, S, E)
    assert jnp.allclose(out_eval, ref, atol=2e-3, rtol=2e-3), "eval-mode mismatch"

    out_train = feed_forward(x, w1, b1, w2, b2, dropout_rate=dropout_rate,
                             training=True, seed=1234, tile_m=128, tile_h=256)
    out_train = jax.block_until_ready(out_train)
    assert out_train.shape == (B, S, E)
    assert bool(jnp.all(jnp.isfinite(out_train)))
    assert not bool(jnp.allclose(out_train, out_eval)), "dropout had no effect"

    print("KERNEL_OK")
</pallas_src>

<mosaic_0001>
module attributes {stable_mosaic.version = 11 : i64} {
  func.func @_ffn_kernel(%arg0: i32, %arg1: i32, %arg2: memref<1xi32, #tpu.memory_space<smem>>, %arg3: memref<128x128xf32, #tpu.memory_space<vmem>>, %arg4: memref<128x256xf32, #tpu.memory_space<vmem>>, %arg5: memref<1x256xf32, #tpu.memory_space<vmem>>, %arg6: memref<256x128xf32, #tpu.memory_space<vmem>>, %arg7: memref<1x128xf32, #tpu.memory_space<vmem>>, %arg8: memref<128x128xf32, #tpu.memory_space<vmem>>, %arg9: memref<128x128xf32, #tpu.memory_space<vmem>>) attributes {dimension_semantics = [#tpu.dimension_semantics<parallel>, #tpu.dimension_semantics<arbitrary>], iteration_bounds = array<i64: 2, 2>, scalar_prefetch = 1 : i64, scratch_operands = 1 : i64, tpu.core_type = #tpu.core_type<tc>, window_params = [{transform_indices = @transform_0, window_bounds = array<i64: 128, 128>}, {transform_indices = @transform_1, window_bounds = array<i64: 128, 256>}, {transform_indices = @transform_2, window_bounds = array<i64: 1, 256>}, {transform_indices = @transform_3, window_bounds = array<i64: 256, 128>}, {pipeline_mode = #tpu.pipeline_mode<synchronous>, transform_indices = @transform_4, window_bounds = array<i64: 1, 128>}, {transform_indices = @transform_5, window_bounds = array<i64: 128, 128>}]} {
    %c0_i32 = arith.constant 0 : i32
    %0 = arith.cmpi eq, %arg1, %c0_i32 : i32
    %1 = arith.extui %0 : i1 to i32
    %c0_i32_0 = arith.constant 0 : i32
    %2 = arith.cmpi ne, %1, %c0_i32_0 : i32
    scf.if %2 {
      %cst_15 = arith.constant 0.000000e+00 : f32
      %19 = vector.broadcast %cst_15 : f32 to vector<128x128xf32>
      %c0_16 = arith.constant 0 : index
      %c0_17 = arith.constant 0 : index
      %20 = vector.load %arg9[%c0_16, %c0_17] : memref<128x128xf32, #tpu.memory_space<vmem>>, vector<128x128xf32>
      tpu.vector_store %arg9[%c0_16, %c0_17], %19 {strides = array<i32>} : memref<128x128xf32, #tpu.memory_space<vmem>>, vector<128x128xf32>,
    } else {
    }
    %c0 = arith.constant 0 : index
    %c0_1 = arith.constant 0 : index
    %3 = vector.load %arg3[%c0, %c0_1] : memref<128x128xf32, #tpu.memory_space<vmem>>, vector<128x128xf32>
    %c0_2 = arith.constant 0 : index
    %c0_3 = arith.constant 0 : index
    %4 = vector.load %arg4[%c0_2, %c0_3] : memref<128x256xf32, #tpu.memory_space<vmem>>, vector<128x256xf32>
    %cst = arith.constant dense<0.000000e+00> : vector<128x256xf32>
    %5 = tpu.matmul %3, %4, %cst {dimension_numbers = #tpu.dot_dimension_numbers<[1], [0], [0], [1], [0, 0, 1, 1], [], []>} : vector<128x128xf32>, vector<128x256xf32>, vector<128x256xf32> -> vector<128x256xf32>
    %c0_4 = arith.constant 0 : index
    %c0_5 = arith.constant 0 : index
    %6 = vector.load %arg5[%c0_4, %c0_5] : memref<1x256xf32, #tpu.memory_space<vmem>>, vector<1x256xf32>
    %7 = vector.broadcast %6 : vector<1x256xf32> to vector<128x256xf32>
    %8 = arith.addf %5, %7 : vector<128x256xf32>
    %cst_6 = arith.constant 0.000000e+00 : f32
    %9 = vector.broadcast %cst_6 : f32 to vector<128x256xf32>
    %10 = arith.maximumf %8, %9 : vector<128x256xf32>
    %c0_7 = arith.constant 0 : index
    %c0_8 = arith.constant 0 : index
    %11 = vector.load %arg9[%c0_7, %c0_8] : memref<128x128xf32, #tpu.memory_space<vmem>>, vector<128x128xf32>
    %c0_9 = arith.constant 0 : index
    %c0_10 = arith.constant 0 : index
    %12 = vector.load %arg6[%c0_9, %c0_10] : memref<256x128xf32, #tpu.memory_space<vmem>>, vector<256x128xf32>
    %cst_11 = arith.constant dense<0.000000e+00> : vector<128x128xf32>
    %13 = tpu.matmul %10, %12, %cst_11 {dimension_numbers = #tpu.dot_dimension_numbers<[1], [0], [0], [1], [0, 0, 1, 1], [], []>} : vector<128x256xf32>, vector<256x128xf32>, vector<128x128xf32> -> vector<128x128xf32>
    %14 = arith.addf %11, %13 : vector<128x128xf32>
    %c0_12 = arith.constant 0 : index
    %c0_13 = arith.constant 0 : index
    %15 = vector.load %arg9[%c0_12, %c0_13] : memref<128x128xf32, #tpu.memory_space<vmem>>, vector<128x128xf32>
    tpu.vector_store %arg9[%c0_12, %c0_13], %14 {strides = array<i32>} : memref<128x128xf32, #tpu.memory_space<vmem>>, vector<128x128xf32>,
    %c1_i32 = arith.constant 1 : i32
    %16 = arith.cmpi eq, %arg1, %c1_i32 : i32
    %17 = arith.extui %16 : i1 to i32
    %c0_i32_14 = arith.constant 0 : i32
    %18 = arith.cmpi ne, %17, %c0_i32_14 : i32
    scf.if %18 {
      %c0_15 = arith.constant 0 : index
      %c0_16 = arith.constant 0 : index
      %19 = vector.load %arg9[%c0_15, %c0_16] : memref<128x128xf32, #tpu.memory_space<vmem>>, vector<128x128xf32>
      %c0_17 = arith.constant 0 : index
      %c0_18 = arith.constant 0 : index
      %20 = vector.load %arg7[%c0_17, %c0_18] : memref<1x128xf32, #tpu.memory_space<vmem>>, vector<1x128xf32>
      %21 = vector.broadcast %20 : vector<1x128xf32> to vector<128x128xf32>
      %22 = arith.addf %19, %21 : vector<128x128xf32>
      %c0_19 = arith.constant 0 : index
      %c0_20 = arith.constant 0 : index
      %23 = vector.load %arg8[%c0_19, %c0_20] : memref<128x128xf32, #tpu.memory_space<vmem>>, vector<128x128xf32>
      tpu.vector_store %arg8[%c0_19, %c0_20], %22 {strides = array<i32>} : memref<128x128xf32, #tpu.memory_space<vmem>>, vector<128x128xf32>,
    } else {
    }
    return
  }
  func.func @transform_0(%arg0: i32, %arg1: i32, %arg2: memref<1xi32, #tpu.memory_space<smem>>) -> (i32, i32) {
    %c0_i32 = arith.constant 0 : i32
    %c0_i32_0 = arith.constant 0 : i32
    return %arg0, %c0_i32 : i32, i32
  }
  func.func @transform_1(%arg0: i32, %arg1: i32, %arg2: memref<1xi32, #tpu.memory_space<smem>>) -> (i32, i32) {
    %c0_i32 = arith.constant 0 : i32
    %c0_i32_0 = arith.constant 0 : i32
    return %c0_i32, %arg1 : i32, i32
  }
  func.func @transform_2(%arg0: i32, %arg1: i32, %arg2: memref<1xi32, #tpu.memory_space<smem>>) -> (i32, i32) {
    %c0_i32 = arith.constant 0 : i32
    %c0_i32_0 = arith.constant 0 : i32
    return %c0_i32, %arg1 : i32, i32
  }
  func.func @transform_3(%arg0: i32, %arg1: i32, %arg2: memref<1xi32, #tpu.memory_space<smem>>) -> (i32, i32) {
    %c0_i32 = arith.constant 0 : i32
    %c0_i32_0 = arith.constant 0 : i32
    return %arg1, %c0_i32 : i32, i32
  }
  func.func @transform_4(%arg0: i32, %arg1: i32, %arg2: memref<1xi32, #tpu.memory_space<smem>>) -> (i32, i32) {
    %c0_i32 = arith.constant 0 : i32
    %c0_i32_0 = arith.constant 0 : i32
    %c0_i32_1 = arith.constant 0 : i32
    return %c0_i32, %c0_i32_0 : i32, i32
  }
  func.func @transform_5(%arg0: i32, %arg1: i32, %arg2: memref<1xi32, #tpu.memory_space<smem>>) -> (i32, i32) {
    %c0_i32 = arith.constant 0 : i32
    %c0_i32_0 = arith.constant 0 : i32
    return %arg0, %c0_i32 : i32, i32
  }
}

</mosaic_0001>

<llo_original>
// kernel: tpu_custom_call.1
$region0: #{tpu_custom_call.1}
  #allocation0 [shape = 'u32[]', space=smem, size = 0x4, offset = 0x4, fixed_abs, tag = 'smem constant byte address 0x4 - core index']
  #allocation1 [shape = 'u32[144,128]{1,0:T(1,128)}', space=vmem, size = 0x12000, scoped, tag = 'internal scratch']
  #allocation2 [shape = 'f32[128,128]{1,0:T(8,128)}', space=vmem, size = 0x10000, scoped, tag = 'scratch operand']
  #allocation3 [shape = 's32[1]{0}', space=sflag, size = 0x4, scoped, tag = 'scoped memory for tpu_custom_call.1']
  #allocation4 [shape = 's32[1]{0:T(128)S(6)}', space=smem, size = 0x200, scoped, tag = 'prefetched SMEM operand 0']
  %s0 = inlined_call_operand.<no memory space> [shape: s32[1], index: 0, kind: input, shape index: {}]
  %s1 = inlined_call_operand.hbm [shape: f32[256,128], index: 1, kind: input, shape index: {}]
  %s2 = inlined_call_operand.hbm [shape: f32[128,512], index: 2, kind: input, shape index: {}]
  %s3 = inlined_call_operand.vmem [shape: f32[1,512], index: 3, kind: input, shape index: {}]
  %s4 = inlined_call_operand.hbm [shape: f32[512,128], index: 4, kind: input, shape index: {}]
  %s5 = inlined_call_operand.vmem [shape: f32[1,128], index: 5, kind: input, shape index: {}]
  %s6 = inlined_call_operand.hbm [shape: f32[256,128], index: 6, kind: output, shape index: {}]
  %s7 = sld [smem:[#allocation0]]
  $region73: #{tpu_custom_call.1} parent=0
    _
  %s9 = ssub.s32 1, %s7
  %s10 = scalar_select 0, %s9, %s7
  %11 = sst [smem:[#allocation4]] %s0
  $region1: #{tpu_custom_call.1} parent=0
    #allocation5 [shape = 'u8[131072]{0}', space=vmem, size = 0x20000, scoped, tag = 'input window, operand 1']
    #allocation6 [shape = 's32[2]{0}', space=sflag, size = 0x8, scoped, tag = 'scoped memory for tpu_custom_call.1']
    #allocation7 [shape = 's32[2]{0}', space=sflag, size = 0x8, scoped, tag = 'scoped memory for tpu_custom_call.1']
    #allocation8 [shape = 'u8[262144]{0}', space=vmem, size = 0x40000, scoped, tag = 'input window, operand 2']
    #allocation9 [shape = 's32[2]{0}', space=sflag, size = 0x8, scoped, tag = 'scoped memory for tpu_custom_call.1']
    #allocation10 [shape = 'u8[262144]{0}', space=vmem, size = 0x40000, scoped, tag = 'input window, operand 4']
    #allocation11 [shape = 'u8[131072]{0}', space=vmem, size = 0x20000, scoped, tag = 'output window, operand 0']
    %12 = vsyncpa [#allocation6], 0
    %s13 = scalar_lea.sflag [#allocation6], 1
    %14 = vsyncpa %s13, 0
    %15 = vsyncpa [#allocation9], 0
    %s16 = scalar_lea.sflag [#allocation9], 1
    %17 = vsyncpa %s16, 0
    %18 = vsyncpa [#allocation7], 0
    %s19 = scalar_lea.sflag [#allocation7], 1
    %20 = vsyncpa %s19, 0
    loop: start=0, step=1, limit=6
    $region2: #{tpu_custom_call.1} parent=1 // loop_pre_header
      _
    $region3: #{tpu_custom_call.1} parent=1 // loop_header
      %s22 = sphi 0, %s26
      %p23 = scmp.ge.s32.totalorder %s22, 6
      %s29 = sphi 0, %s41
      %s30 = sphi 0, %s37
      %s31 = sphi 0, %s29
      %s32 = sphi 0, %s30
      %s33 = sphi 0, %s31
      %s34 = sphi 0, %s32
      %s44 = sphi 0, %s46
      %s47 = sphi 0, %s44
      %s48 = sphi 0, %s47
      %s64 = sphi 0, %s48
      %s70 = sphi 0, %s72
      %s73 = sphi 0, %s70
      %s74 = sphi 0, %s73
      %s90 = sphi 0, %s74
      %s96 = sphi 0, %s98
      %s99 = sphi 0, %s96
      %s100 = sphi 0, %s99
      %s116 = sphi 0, %s100
      %s122 = sphi 0, %s124
      %s125 = sphi 0, %s122
      %s126 = sphi 0, %s125
      %s142 = sphi 0, %s126
      %s146 = sphi 0, %s146
      %s148 = sphi 0, %s146
      %s149 = sphi 0, %s148
      %s163 = sphi 0, %s149
      %s169 = sphi 0, %s171
      %s172 = sphi 0, %s169
      %s173 = sphi 0, %s172
      %s189 = sphi 0, %s173
    $region4: #{tpu_custom_call.1} parent=1 // loop_header_branch
      %25 = sbr.rel (%p23) target = $region8
    $region5: #{tpu_custom_call.1} parent=1 // loop_body
      %s27 = ssub.s32 %s22, 1
      %s28 = ssub.s32 %s22, 2
      %s35 = sadd.s32 1, %s30
      %p36 = scmp.ge.s32.totalorder %s35, 2
      %s37 = scalar_select %p36, 0, %s35
      %s38 = sadd.s32 1, %s29
      %s39 = scalar_select %p36, %s38, %s29
      %p40 = scmp.ge.s32.totalorder %s39, 2
      %s41 = scalar_select %p40, 0, %s39
      %s42 = ssub.s32 %s29, %s41
      %p43 = scmp.eq.s32.totalorder %s42, 0
      %s45 = sadd.s32 %s44, 1
      %s46 = scalar_select %p43, %s44, %s45
      %p49 = pneg %p43
      %p50 = scmp.eq.s32.totalorder %s22, 3
      %p51 = por %p49, %p50
      %p52 = scmp.ne.s32.totalorder %s44, %s47
      %p53 = scmp.eq.s32.totalorder %s22, 0
      %p54 = por %p52, %p53
      %p55 = scmp.ne.s32.totalorder %s44, %s47
      %p56 = scmp.eq.s32.totalorder %s27, 3
      %p57 = por %p55, %p56
      %p58 = scmp.ne.s32.totalorder %s47, %s48
      %p59 = scmp.eq.s32.totalorder %s27, 0
      %p60 = por %p58, %p59
      %p61 = scmp.ne.s32.totalorder %s47, %s48
      %p62 = scmp.eq.s32.totalorder %s28, 3
      %p63 = por %p61, %p62
      %p65 = scmp.ne.s32.totalorder %s48, %s64
      %p66 = scmp.eq.s32.totalorder %s28, 0
      %p67 = por %p65, %p66
      %s68 = ssub.s32 %s30, %s37
      %p69 = scmp.eq.s32.totalorder %s68, 0
      %s71 = sadd.s32 %s70, 1
      %s72 = scalar_select %p69, %s70, %s71
      %p75 = pneg %p69
      %p76 = scmp.eq.s32.totalorder %s22, 3
      %p77 = por %p75, %p76
      %p78 = scmp.ne.s32.totalorder %s70, %s73
      %p79 = scmp.eq.s32.totalorder %s22, 0
      %p80 = por %p78, %p79
      %p81 = scmp.ne.s32.totalorder %s70, %s73
      %p82 = scmp.eq.s32.totalorder %s27, 3
      %p83 = por %p81, %p82
      %p84 = scmp.ne.s32.totalorder %s73, %s74
      %p85 = scmp.eq.s32.totalorder %s27, 0
      %p86 = por %p84, %p85
      %p87 = scmp.ne.s32.totalorder %s73, %s74
      %p88 = scmp.eq.s32.totalorder %s28, 3
      %p89 = por %p87, %p88
      %p91 = scmp.ne.s32.totalorder %s74, %s90
      %p92 = scmp.eq.s32.totalorder %s28, 0
      %p93 = por %p91, %p92
      %s94 = ssub.s32 %s30, %s37
      %p95 = scmp.eq.s32.totalorder %s94, 0
      %s97 = sadd.s32 %s96, 1
      %s98 = scalar_select %p95, %s96, %s97
      %p101 = pneg %p95
      %p102 = scmp.eq.s32.totalorder %s22, 3
      %p103 = por %p101, %p102
      %p104 = scmp.ne.s32.totalorder %s96, %s99
      %p105 = scmp.eq.s32.totalorder %s22, 0
      %p106 = por %p104, %p105
      %p107 = scmp.ne.s32.totalorder %s96, %s99
      %p108 = scmp.eq.s32.totalorder %s27, 3
      %p109 = por %p107, %p108
      %p110 = scmp.ne.s32.totalorder %s99, %s100
      %p111 = scmp.eq.s32.totalorder %s27, 0
      %p112 = por %p110, %p111
      %p113 = scmp.ne.s32.totalorder %s99, %s100
      %p114 = scmp.eq.s32.totalorder %s28, 3
      %p115 = por %p113, %p114
      %p117 = scmp.ne.s32.totalorder %s100, %s116
      %p118 = scmp.eq.s32.totalorder %s28, 0
      %p119 = por %p117, %p118
      %s120 = ssub.s32 %s30, %s37
      %p121 = scmp.eq.s32.totalorder %s120, 0
      %s123 = sadd.s32 %s122, 1
      %s124 = scalar_select %p121, %s122, %s123
      %p127 = pneg %p121
      %p128 = scmp.eq.s32.totalorder %s22, 3
      %p129 = por %p127, %p128
      %p130 = scmp.ne.s32.totalorder %s122, %s125
      %p131 = scmp.eq.s32.totalorder %s22, 0
      %p132 = por %p130, %p131
      %p133 = scmp.ne.s32.totalorder %s122, %s125
      %p134 = scmp.eq.s32.totalorder %s27, 3
      %p135 = por %p133, %p134
      %p136 = scmp.ne.s32.totalorder %s125, %s126
      %p137 = scmp.eq.s32.totalorder %s27, 0
      %p138 = por %p136, %p137
      %p139 = scmp.ne.s32.totalorder %s125, %s126
      %p140 = scmp.eq.s32.totalorder %s28, 3
      %p141 = por %p139, %p140
      %p143 = scmp.ne.s32.totalorder %s126, %s142
      %p144 = scmp.eq.s32.totalorder %s28, 0
      %p145 = por %p143, %p144
      %s147 = sadd.s32 %s146, 1
      %p150 = scmp.eq.s32.totalorder %s22, 3
      %p151 = scmp.ne.s32.totalorder %s146, %s148
      %p152 = scmp.eq.s32.totalorder %s22, 0
      %p153 = por %p151, %p152
      %p154 = scmp.ne.s32.totalorder %s146, %s148
      %p155 = scmp.eq.s32.totalorder %s27, 3
      %p156 = por %p154, %p155
      %p157 = scmp.ne.s32.totalorder %s148, %s149
      %p158 = scmp.eq.s32.totalorder %s27, 0
      %p159 = por %p157, %p158
      %p160 = scmp.ne.s32.totalorder %s148, %s149
      %p161 = scmp.eq.s32.totalorder %s28, 3
      %p162 = por %p160, %p161
      %p164 = scmp.ne.s32.totalorder %s149, %s163
      %p165 = scmp.eq.s32.totalorder %s28, 0
      %p166 = por %p164, %p165
      %s167 = ssub.s32 %s29, %s41
      %p168 = scmp.eq.s32.totalorder %s167, 0
      %s170 = sadd.s32 %s169, 1
      %s171 = scalar_select %p168, %s169, %s170
      %p174 = pneg %p168
      %p175 = scmp.eq.s32.totalorder %s22, 3
      %p176 = por %p174, %p175
      %p177 = scmp.ne.s32.totalorder %s169, %s172
      %p178 = scmp.eq.s32.totalorder %s22, 0
      %p179 = por %p177, %p178
      %p180 = scmp.ne.s32.totalorder %s169, %s172
      %p181 = scmp.eq.s32.totalorder %s27, 3
      %p182 = por %p180, %p181
      %p183 = scmp.ne.s32.totalorder %s172, %s173
      %p184 = scmp.eq.s32.totalorder %s27, 0
      %p185 = por %p183, %p184
      %p186 = scmp.ne.s32.totalorder %s172, %s173
      %p187 = scmp.eq.s32.totalorder %s28, 3
      %p188 = por %p186, %p187
      %p190 = scmp.ne.s32.totalorder %s173, %s189
      %p191 = scmp.eq.s32.totalorder %s28, 0
      %p192 = por %p190, %p191
      %p193 = scmp.le.s32.totalorder 1, %s22
      %p194 = scmp.lt.s32.totalorder %s22, 5
      %p195 = pnand %p193, %p194
      %p196 = pneg %p195
      // Predicated region
      $region9: #{tpu_custom_call.1} parent=5 // pred_check
        _
      $region10: #{tpu_custom_call.1} parent=5 // pred_check_branch
        %198 = sbr.rel (%p195) target = $region12
      $region11: #{tpu_custom_call.1} parent=5 // pred_region
        %s199 = ssub.s32 %s22, 1
        // Predicated region
        $region13: #{tpu_custom_call.1} parent=11 // pred_check
          %p200 = pneg %p159
        $region14: #{tpu_custom_call.1} parent=11 // pred_check_branch
          %202 = sbr.rel (%p200) target = $region16
        $region15: #{tpu_custom_call.1} parent=11 // pred_region
          _
        $region16: #{tpu_custom_call.1} parent=11 // pred_fallthru
          _
      $region12: #{tpu_custom_call.1} parent=5 // pred_fallthru
        _
      %p203 = scmp.lt.s32.totalorder %s22, 4
      // Predicated region
      $region17: #{tpu_custom_call.1} parent=5 // pred_check
        %p204 = pneg %p203
      $region18: #{tpu_custom_call.1} parent=5 // pred_check_branch
        %206 = sbr.rel (%p204) target = $region20
      $region19: #{tpu_custom_call.1} parent=5 // pred_region
        // Predicated region
        $region21: #{tpu_custom_call.1} parent=19 // pred_check
          %p207 = pneg %p54
        $region22: #{tpu_custom_call.1} parent=19 // pred_check_branch
          %209 = sbr.rel (%p207) target = $region24
        $region23: #{tpu_custom_call.1} parent=19 // pred_region
          %s210 = sand.u32 %s44, 1
          %s211 = scalar_lea.sflag [#allocation6], %s210
          %s212 = sand.u32 %s44, 1
          %s213 = smul.addr %s212, 128
          %s214 = scalar_lea.vmem [#allocation5], %s213
          %s215 = smul.u32 16, %s29
          %s217 = ssub.s32 2048, 2048
          %218 = vsyncadd %s211, %s217
          %s219 = smul.addr %s215, 128
          %s220 = scalar_lea.hbm %s1, %s219
          %s221 = sshll.u32 %s214, 4
          %s222 = int_to_ptr.vmem [resolvable:$true] %s221
          %227 = dma.hbm_to_vmem [thread:$0]  %s220, 2048, %s222, %s211, 128, 128, 8
        $region24: #{tpu_custom_call.1} parent=19 // pred_fallthru
          _
        // Predicated region
        $region25: #{tpu_custom_call.1} parent=19 // pred_check
          %p228 = pneg %p80
        $region26: #{tpu_custom_call.1} parent=19 // pred_check_branch
          %230 = sbr.rel (%p228) target = $region28
        $region27: #{tpu_custom_call.1} parent=19 // pred_region
          %s231 = sand.u32 %s22, 1
          %s232 = scalar_lea.sflag [#allocation9], %s231
          %s233 = sand.u32 %s70, 1
          %s234 = smul.addr %s233, 256
          %s235 = scalar_lea.vmem [#allocation8], %s234
          %s236 = smul.u32 2, %s30
          %s238 = ssub.s32 4096, 4096
          %239 = vsyncadd %s232, %s238
          %s240 = smul.addr %s236, 128
          %s241 = scalar_lea.hbm %s2, %s240
          %s242 = sshll.u32 %s235, 4
          %s243 = int_to_ptr.vmem [resolvable:$true] %s242
          %248 = dma.hbm_to_vmem [thread:$0]  %s241, 4096, %s243, %s232, 512, 256, 16
        $region28: #{tpu_custom_call.1} parent=19 // pred_fallthru
          _
        // Predicated region
        $region29: #{tpu_custom_call.1} parent=19 // pred_check
          %p249 = pneg %p106
        $region30: #{tpu_custom_call.1} parent=19 // pred_check_branch
          %251 = sbr.rel (%p249) target = $region32
        $region31: #{tpu_custom_call.1} parent=19 // pred_region
          %s252 = smul.u32 2, %s30
          %p253 = scmp.lt.s32.totalorder %s252, 3
          %s254 = scalar_select %p253, %s252, 3
          %s255 = scalar_lea.vmem %s3, %s254
          %s256 = smul.u32 2, %s30
        $region32: #{tpu_custom_call.1} parent=19 // pred_fallthru
          _
        // Predicated region
        $region33: #{tpu_custom_call.1} parent=19 // pred_check
          %p257 = pneg %p132
        $region34: #{tpu_custom_call.1} parent=19 // pred_check_branch
          %259 = sbr.rel (%p257) target = $region36
        $region35: #{tpu_custom_call.1} parent=19 // pred_region
          %s260 = sand.u32 %s22, 1
          %s261 = scalar_lea.sflag [#allocation9], %s260
          %s262 = sand.u32 %s122, 1
          %s263 = smul.addr %s262, 256
          %s264 = scalar_lea.vmem [#allocation10], %s263
          %s265 = smul.u32 32, %s30
          %s267 = ssub.s32 4096, 4096
          %268 = vsyncadd %s261, %s267
          %s269 = smul.addr %s265, 128
          %s270 = scalar_lea.hbm %s4, %s269
          %s271 = sshll.u32 %s264, 4
          %s272 = int_to_ptr.vmem [resolvable:$true] %s271
          %277 = dma.hbm_to_vmem [thread:$0]  %s270, 4096, %s272, %s261, 128, 128, 8
        $region36: #{tpu_custom_call.1} parent=19 // pred_fallthru
          _
      $region20: #{tpu_custom_call.1} parent=5 // pred_fallthru
        _
      %p278 = scmp.le.s32.totalorder 1, %s22
      %p279 = scmp.lt.s32.totalorder %s22, 5
      %p280 = pnand %p278, %p279
      %p281 = pneg %p280
      // Predicated region
      $region37: #{tpu_custom_call.1} parent=5 // pred_check
        _
      $region38: #{tpu_custom_call.1} parent=5 // pred_check_branch
        %283 = sbr.rel (%p280) target = $region40
      $region39: #{tpu_custom_call.1} parent=5 // pred_region
        %s284 = ssub.s32 %s22, 1
        %s285 = sand.u32 %s47, 1
        %s286 = scalar_lea.sflag [#allocation6], %s285
        %s287 = sand.u32 %s47, 1
        %s288 = smul.addr %s287, 128
        %s289 = scalar_lea.vmem [#allocation5], %s288
        // Predicated region
        $region41: #{tpu_custom_call.1} parent=39 // pred_check
          %p290 = pneg %p60
        $region42: #{tpu_custom_call.1} parent=39 // pred_check_branch
          %292 = sbr.rel (%p290) target = $region44
        $region43: #{tpu_custom_call.1} parent=39 // pred_region
          %293 = dma.done %s286, 2048
        $region44: #{tpu_custom_call.1} parent=39 // pred_fallthru
          _
        %s294 = sand.u32 %s27, 1
        %s295 = scalar_lea.sflag [#allocation9], %s294
        %s296 = sand.u32 %s73, 1
        %s297 = smul.addr %s296, 256
        %s298 = scalar_lea.vmem [#allocation8], %s297
        // Predicated region
        $region45: #{tpu_custom_call.1} parent=39 // pred_check
          %p299 = pneg %p86
        $region46: #{tpu_custom_call.1} parent=39 // pred_check_branch
          %301 = sbr.rel (%p299) target = $region48
        $region47: #{tpu_custom_call.1} parent=39 // pred_region
          %302 = dma.done %s295, 4096
        $region48: #{tpu_custom_call.1} parent=39 // pred_fallthru
          _
        %s303 = sand.u32 %s27, 1
        %s304 = scalar_lea.sflag [#allocation9], %s303
        %s305 = sand.u32 %s125, 1
        %s306 = smul.addr %s305, 256
        %s307 = scalar_lea.vmem [#allocation10], %s306
        // Predicated region
        $region49: #{tpu_custom_call.1} parent=39 // pred_check
          %p308 = pneg %p138
        $region50: #{tpu_custom_call.1} parent=39 // pred_check_branch
          %310 = sbr.rel (%p308) target = $region52
        $region51: #{tpu_custom_call.1} parent=39 // pred_region
          %311 = dma.done %s304, 4096
        $region52: #{tpu_custom_call.1} parent=39 // pred_fallthru
          _
        %s312 = sand.u32 %s47, 1
        %s313 = scalar_lea.sflag [#allocation6], %s312
        %s314 = sand.u32 %s47, 1
        %s315 = smul.addr %s314, 128
        %s316 = scalar_lea.vmem [#allocation5], %s315
        %p317 = pneg %p60
        %p318 = pneg %p57
        %s319 = sand.u32 %s27, 1
        %s320 = scalar_lea.sflag [#allocation9], %s319
        %s321 = sand.u32 %s73, 1
        %s322 = smul.addr %s321, 256
        %s323 = scalar_lea.vmem [#allocation8], %s322
        %p324 = pneg %p86
        %p325 = pneg %p83
        %s326 = smul.u32 2, %s32
        %p327 = scmp.lt.s32.totalorder %s326, 3
        %s328 = scalar_select %p327, %s326, 3
        %s329 = scalar_lea.vmem %s3, %s328
        %p330 = pneg %p112
        %p331 = pneg %p109
        %s332 = sand.u32 %s27, 1
        %s333 = scalar_lea.sflag [#allocation9], %s332
        %s334 = sand.u32 %s125, 1
        %s335 = smul.addr %s334, 256
        %s336 = scalar_lea.vmem [#allocation10], %s335
        %p337 = pneg %p138
        %p338 = pneg %p135
        %p339 = pneg %p159
        %p340 = pneg %p156
        %p341 = pneg %p185
        %p342 = pneg %p182
        %s343 = sand.u32 %s172, 1
        %s344 = scalar_lea.sflag [#allocation7], %s343
        %s345 = sand.u32 %s172, 1
        %s346 = smul.addr %s345, 128
        %s347 = scalar_lea.vmem [#allocation11], %s346
        %s348 = smul.u32 16, %s31
        %s349 = smul.u32 2, %s32
        %s350 = smul.u32 2, %s32
        %p351 = scmp.lt.s32.totalorder %s350, 3
        %s352 = scalar_select %p351, %s350, 3
        %s353 = scalar_lea.vmem %s3, %s352
        %s354 = smul.u32 2, %s32
        %s355 = smul.u32 32, %s32
        %s356 = smul.u32 16, %s31
        %p357 = scmp.eq.s32.totalorder %s32, 0
        // Predicated region
        $region53: #{tpu_custom_call.1} parent=39 // pred_check
          %p358 = pneg %p357
        $region54: #{tpu_custom_call.1} parent=39 // pred_check_branch
          %360 = sbr.rel (%p358) target = $region56
        $region55: #{tpu_custom_call.1} parent=39 // pred_region
          %361 = vst [vmem:[#allocation2] sm:$0xff] 0.0
          %362 = vst [vmem:[#allocation2 + $0x8] sm:$0xff] 0.0
          %363 = vst [vmem:[#allocation2 + $0x10] sm:$0xff] 0.0
          %364 = vst [vmem:[#allocation2 + $0x18] sm:$0xff] 0.0
          %365 = vst [vmem:[#allocation2 + $0x20] sm:$0xff] 0.0
          %366 = vst [vmem:[#allocation2 + $0x28] sm:$0xff] 0.0
          %367 = vst [vmem:[#allocation2 + $0x30] sm:$0xff] 0.0
          %368 = vst [vmem:[#allocation2 + $0x38] sm:$0xff] 0.0
          %369 = vst [vmem:[#allocation2 + $0x40] sm:$0xff] 0.0
          %370 = vst [vmem:[#allocation2 + $0x48] sm:$0xff] 0.0
          %371 = vst [vmem:[#allocation2 + $0x50] sm:$0xff] 0.0
          %372 = vst [vmem:[#allocation2 + $0x58] sm:$0xff] 0.0
          %373 = vst [vmem:[#allocation2 + $0x60] sm:$0xff] 0.0
          %374 = vst [vmem:[#allocation2 + $0x68] sm:$0xff] 0.0
          %375 = vst [vmem:[#allocation2 + $0x70] sm:$0xff] 0.0
          %376 = vst [vmem:[#allocation2 + $0x78] sm:$0xff] 0.0
        $region56: #{tpu_custom_call.1} parent=39 // pred_fallthru
          _
        %v377 = vld [vmem:[%s289] sm:$0xff]
        %v378 = vld [vmem:[%s289 + $0x8] sm:$0xff]
        %v379 = vld [vmem:[%s289 + $0x10] sm:$0xff]
        %v380 = vld [vmem:[%s289 + $0x18] sm:$0xff]
        %v381 = vld [vmem:[%s289 + $0x20] sm:$0xff]
        %v382 = vld [vmem:[%s289 + $0x28] sm:$0xff]
        %v383 = vld [vmem:[%s289 + $0x30] sm:$0xff]
        %v384 = vld [vmem:[%s289 + $0x38] sm:$0xff]
        %v385 = vld [vmem:[%s289 + $0x40] sm:$0xff]
        %v386 = vld [vmem:[%s289 + $0x48] sm:$0xff]
        %v387 = vld [vmem:[%s289 + $0x50] sm:$0xff]
        %v388 = vld [vmem:[%s289 + $0x58] sm:$0xff]
        %v389 = vld [vmem:[%s289 + $0x60] sm:$0xff]
        %v390 = vld [vmem:[%s289 + $0x68] sm:$0xff]
        %v391 = vld [vmem:[%s289 + $0x70] sm:$0xff]
        %v392 = vld [vmem:[%s289 + $0x78] sm:$0xff]
        %v393 = vld [vmem:[%s298] sm:$0xff]
        %v394 = vld [vmem:[%s298 + $0x8] sm:$0xff]
        %v395 = vld [vmem:[%s298 + $0x10] sm:$0xff]
        %v396 = vld [vmem:[%s298 + $0x18] sm:$0xff]
        %v397 = vld [vmem:[%s298 + $0x20] sm:$0xff]
        %v398 = vld [vmem:[%s298 + $0x28] sm:$0xff]
        %v399 = vld [vmem:[%s298 + $0x30] sm:$0xff]
        %v400 = vld [vmem:[%s298 + $0x38] sm:$0xff]
        %v401 = vld [vmem:[%s298 + $0x40] sm:$0xff]
        %v402 = vld [vmem:[%s298 + $0x48] sm:$0xff]
        %v403 = vld [vmem:[%s298 + $0x50] sm:$0xff]
        %v404 = vld [vmem:[%s298 + $0x58] sm:$0xff]
        %v405 = vld [vmem:[%s298 + $0x60] sm:$0xff]
        %v406 = vld [vmem:[%s298 + $0x68] sm:$0xff]
        %v407 = vld [vmem:[%s298 + $0x70] sm:$0xff]
        %v408 = vld [vmem:[%s298 + $0x78] sm:$0xff]
        %v409 = vld [vmem:[%s298 + $0x80] sm:$0xff]
        %v410 = vld [vmem:[%s298 + $0x88] sm:$0xff]
        %v411 = vld [vmem:[%s298 + $0x90] sm:$0xff]
        %v412 = vld [vmem:[%s298 + $0x98] sm:$0xff]
        %v413 = vld [vmem:[%s298 + $0xa0] sm:$0xff]
        %v414 = vld [vmem:[%s298 + $0xa8] sm:$0xff]
        %v415 = vld [vmem:[%s298 + $0xb0] sm:$0xff]
        %v416 = vld [vmem:[%s298 + $0xb8] sm:$0xff]
        %v417 = vld [vmem:[%s298 + $0xc0] sm:$0xff]
        %v418 = vld [vmem:[%s298 + $0xc8] sm:$0xff]
        %v419 = vld [vmem:[%s298 + $0xd0] sm:$0xff]
        %v420 = vld [vmem:[%s298 + $0xd8] sm:$0xff]
        %v421 = vld [vmem:[%s298 + $0xe0] sm:$0xff]
        %v422 = vld [vmem:[%s298 + $0xe8] sm:$0xff]
        %v423 = vld [vmem:[%s298 + $0xf0] sm:$0xff]
        %v424 = vld [vmem:[%s298 + $0xf8] sm:$0xff]
        %v425 = vld [vmem:[%s353] sm:$0x3]
        %v427 = vlaneseq
        %v428 = vshrl.u32 %v427, 7
        %v429 = vsub.s32 0, %v428
        %v430 = vrot.slane %v425, %v429
        %v431 = vlaneseq
        %v432 = vshrl.u32 %v431, 7
        %v433 = vsub.s32 1, %v432
        %v434 = vrot.slane %v425, %v433
        %437 = vmatprep.subr.mxu0 %v424
        %438 = vmatpush1.msra.mxu0 %v423
        %439 = vmatprep.subr.mxu0 %v422
        %440 = vmatpush1.msra.mxu0 %v421
        %441 = vmatprep.subr.mxu0 %v420
        %442 = vmatpush1.msra.mxu0 %v419
        %443 = vmatprep.subr.mxu0 %v418
        %444 = vmatpush1.msra.mxu0 %v417
        %445 = vmatprep.subr.mxu0 %v416
        %446 = vmatpush1.msra.mxu0 %v415
        %447 = vmatprep.subr.mxu0 %v414
        %448 = vmatpush1.msra.mxu0 %v413
        %449 = vmatprep.subr.mxu0 %v412
        %450 = vmatpush1.msra.mxu0 %v411
        %451 = vmatprep.subr.mxu0 %v410
        %452 = vmatpush1.msra.mxu0 %v409
        %453 = vmatprep.subr.mxu0 %v408
        %454 = vmatpush1.msra.mxu0 %v407
        %455 = vmatprep.subr.mxu0 %v406
        %456 = vmatpush1.msra.mxu0 %v405
        %457 = vmatprep.subr.mxu0 %v404
        %458 = vmatpush1.msra.mxu0 %v403
        %459 = vmatprep.subr.mxu0 %v402
        %460 = vmatpush1.msra.mxu0 %v401
        %461 = vmatprep.subr.mxu0 %v400
        %462 = vmatpush1.msra.mxu0 %v399
        %463 = vmatprep.subr.mxu0 %v398
        %464 = vmatpush1.msra.mxu0 %v397
        %465 = vmatprep.subr.mxu0 %v396
        %466 = vmatpush1.msra.mxu0 %v395
        %467 = vmatprep.subr.mxu0 %v394
        %468 = vmatpush1.msra.mxu0 %v393
        %469 = vmatprep.subr.mxu0 0.0
        %470 = vmatpush2.msra.mxu0 0.0
        %471 = vmatprep.subr.mxu0 0.0
        %472 = vmatpush2.msra.mxu0 0.0
        %473 = vmatprep.subr.mxu0 0.0
        %474 = vmatpush2.msra.mxu0 0.0
        %475 = vmatprep.subr.mxu0 0.0
        %476 = vmatpush2.msra.mxu0 0.0
        %477 = vmatprep.subr.mxu0 0.0
        %478 = vmatpush2.msra.mxu0 0.0
        %479 = vmatprep.subr.mxu0 0.0
        %480 = vmatpush2.msra.mxu0 0.0
        %481 = vmatprep.subr.mxu0 0.0
        %482 = vmatpush2.msra.mxu0 0.0
        %483 = vmatprep.subr.mxu0 0.0
        %484 = vmatpush2.msra.mxu0 0.0
        %485 = vmatprep.subr.mxu0 0.0
        %486 = vmatpush2.msra.mxu0 0.0
        %487 = vmatprep.subr.mxu0 0.0
        %488 = vmatpush2.msra.mxu0 0.0
        %489 = vmatprep.subr.mxu0 0.0
        %490 = vmatpush2.msra.mxu0 0.0
        %491 = vmatprep.subr.mxu0 0.0
        %492 = vmatpush2.msra.mxu0 0.0
        %493 = vmatprep.subr.mxu0 0.0
        %494 = vmatpush2.msra.mxu0 0.0
        %495 = vmatprep.subr.mxu0 0.0
        %496 = vmatpush2.msra.mxu0 0.0
        %497 = vmatprep.subr.mxu0 0.0
        %498 = vmatpush2.msra.mxu0 0.0
        %499 = vmatprep.subr.mxu0 0.0
        %500 = vmatpush2.msra.mxu0 0.0
        %501 = vmatprep.mubr.f32.mxu0 0.0
        %502 = vmatmul.mubr.f32.gmra.mxu0 %v377
        %v503 = vpop.f32.mrf.mxu0
        %v504 = vadd.f32 %v430, %v503
        %v505 = vpop.f32.mrf.mxu0
        %v506 = vadd.f32 %v434, %v505
        %507 = vmatprep.mubr.f32.mxu0 0.0
        %508 = vmatmul.mubr.f32.gmra.mxu0 %v378
        %v509 = vpop.f32.mrf.mxu0
        %v510 = vadd.f32 %v430, %v509
        %v511 = vpop.f32.mrf.mxu0
        %v512 = vadd.f32 %v434, %v511
        %513 = vmatprep.mubr.f32.mxu0 0.0
        %514 = vmatmul.mubr.f32.gmra.mxu0 %v379
        %v515 = vpop.f32.mrf.mxu0
        %v516 = vadd.f32 %v430, %v515
        %v517 = vpop.f32.mrf.mxu0
        %v518 = vadd.f32 %v434, %v517
        %519 = vmatprep.mubr.f32.mxu0 0.0
        %520 = vmatmul.mubr.f32.gmra.mxu0 %v380
        %v521 = vpop.f32.mrf.mxu0
        %v522 = vadd.f32 %v430, %v521
        %v523 = vpop.f32.mrf.mxu0
        %v524 = vadd.f32 %v434, %v523
        %525 = vmatprep.mubr.f32.mxu0 0.0
        %526 = vmatmul.mubr.f32.gmra.mxu0 %v381
        %v527 = vpop.f32.mrf.mxu0
        %v528 = vadd.f32 %v430, %v527
        %v529 = vpop.f32.mrf.mxu0
        %v530 = vadd.f32 %v434, %v529
        %531 = vmatprep.mubr.f32.mxu0 0.0
        %532 = vmatmul.mubr.f32.gmra.mxu0 %v382
        %v533 = vpop.f32.mrf.mxu0
        %v534 = vadd.f32 %v430, %v533
        %v535 = vpop.f32.mrf.mxu0
        %v536 = vadd.f32 %v434, %v535
        %537 = vmatprep.mubr.f32.mxu0 0.0
        %538 = vmatmul.mubr.f32.gmra.mxu0 %v383
        %v539 = vpop.f32.mrf.mxu0
        %v540 = vadd.f32 %v430, %v539
        %v541 = vpop.f32.mrf.mxu0
        %v542 = vadd.f32 %v434, %v541
        %543 = vmatprep.mubr.f32.mxu0 0.0
        %544 = vmatmul.mubr.f32.gmra.mxu0 %v384
        %v545 = vpop.f32.mrf.mxu0
        %v546 = vadd.f32 %v430, %v545
        %v547 = vpop.f32.mrf.mxu0
        %v548 = vadd.f32 %v434, %v547
        %549 = vmatprep.mubr.f32.mxu0 0.0
        %550 = vmatmul.mubr.f32.gmra.mxu0 %v385
        %v551 = vpop.f32.mrf.mxu0
        %v552 = vadd.f32 %v430, %v551
        %v553 = vpop.f32.mrf.mxu0
        %v554 = vadd.f32 %v434, %v553
        %555 = vmatprep.mubr.f32.mxu0 0.0
        %556 = vmatmul.mubr.f32.gmra.mxu0 %v386
        %v557 = vpop.f32.mrf.mxu0
        %v558 = vadd.f32 %v430, %v557
        %v559 = vpop.f32.mrf.mxu0
        %v560 = vadd.f32 %v434, %v559
        %561 = vmatprep.mubr.f32.mxu0 0.0
        %562 = vmatmul.mubr.f32.gmra.mxu0 %v387
        %v563 = vpop.f32.mrf.mxu0
        %v564 = vadd.f32 %v430, %v563
        %v565 = vpop.f32.mrf.mxu0
        %v566 = vadd.f32 %v434, %v565
        %567 = vmatprep.mubr.f32.mxu0 0.0
        %568 = vmatmul.mubr.f32.gmra.mxu0 %v388
        %v569 = vpop.f32.mrf.mxu0
        %v570 = vadd.f32 %v430, %v569
        %v571 = vpop.f32.mrf.mxu0
        %v572 = vadd.f32 %v434, %v571
        %573 = vmatprep.mubr.f32.mxu0 0.0
        %574 = vmatmul.mubr.f32.gmra.mxu0 %v389
        %v575 = vpop.f32.mrf.mxu0
        %v576 = vadd.f32 %v430, %v575
        %v577 = vpop.f32.mrf.mxu0
        %v578 = vadd.f32 %v434, %v577
        %579 = vmatprep.mubr.f32.mxu0 0.0
        %580 = vmatmul.mubr.f32.gmra.mxu0 %v390
        %v581 = vpop.f32.mrf.mxu0
        %v582 = vadd.f32 %v430, %v581
        %v583 = vpop.f32.mrf.mxu0
        %v584 = vadd.f32 %v434, %v583
        %585 = vmatprep.mubr.f32.mxu0 0.0
        %586 = vmatmul.mubr.f32.gmra.mxu0 %v391
        %v587 = vpop.f32.mrf.mxu0
        %v588 = vadd.f32 %v430, %v587
        %v589 = vpop.f32.mrf.mxu0
        %v590 = vadd.f32 %v434, %v589
        %591 = vmatprep.mubr.f32.mxu0 0.0
        %592 = vmatmul.mubr.f32.gmra.mxu0 %v392
        %v593 = vpop.f32.mrf.mxu0
        %v594 = vadd.f32 %v430, %v593
        %v595 = vpop.f32.mrf.mxu0
        %v596 = vadd.f32 %v434, %v595
        %597 = vdwg.mxu0
        %v598 = vmax.f32 %v504, 0.0
        %v599 = vmax.f32 %v506, 0.0
        %v600 = vmax.f32 %v510, 0.0
        %v601 = vmax.f32 %v512, 0.0
        %v602 = vmax.f32 %v516, 0.0
        %v603 = vmax.f32 %v518, 0.0
        %v604 = vmax.f32 %v522, 0.0
        %v605 = vmax.f32 %v524, 0.0
        %v606 = vmax.f32 %v528, 0.0
        %v607 = vmax.f32 %v530, 0.0
        %v608 = vmax.f32 %v534, 0.0
        %v609 = vmax.f32 %v536, 0.0
        %v610 = vmax.f32 %v540, 0.0
        %v611 = vmax.f32 %v542, 0.0
        %v612 = vmax.f32 %v546, 0.0
        %v613 = vmax.f32 %v548, 0.0
        %v614 = vmax.f32 %v552, 0.0
        %v615 = vmax.f32 %v554, 0.0
        %v616 = vmax.f32 %v558, 0.0
        %v617 = vmax.f32 %v560, 0.0
        %v618 = vmax.f32 %v564, 0.0
        %v619 = vmax.f32 %v566, 0.0
        %v620 = vmax.f32 %v570, 0.0
        %v621 = vmax.f32 %v572, 0.0
        %v622 = vmax.f32 %v576, 0.0
        %v623 = vmax.f32 %v578, 0.0
        %v624 = vmax.f32 %v582, 0.0
        %v625 = vmax.f32 %v584, 0.0
        %v626 = vmax.f32 %v588, 0.0
        %v627 = vmax.f32 %v590, 0.0
        %v628 = vmax.f32 %v594, 0.0
        %v629 = vmax.f32 %v596, 0.0
        %v630 = vld [vmem:[#allocation2] sm:$0xff]
        %v631 = vld [vmem:[#allocation2 + $0x8] sm:$0xff]
        %v632 = vld [vmem:[#allocation2 + $0x10] sm:$0xff]
        %v633 = vld [vmem:[#allocation2 + $0x18] sm:$0xff]
        %v634 = vld [vmem:[#allocation2 + $0x20] sm:$0xff]
        %v635 = vld [vmem:[#allocation2 + $0x28] sm:$0xff]
        %v636 = vld [vmem:[#allocation2 + $0x30] sm:$0xff]
        %v637 = vld [vmem:[#allocation2 + $0x38] sm:$0xff]
        %v638 = vld [vmem:[#allocation2 + $0x40] sm:$0xff]
        %v639 = vld [vmem:[#allocation2 + $0x48] sm:$0xff]
        %v640 = vld [vmem:[#allocation2 + $0x50] sm:$0xff]
        %v641 = vld [vmem:[#allocation2 + $0x58] sm:$0xff]
        %v642 = vld [vmem:[#allocation2 + $0x60] sm:$0xff]
        %v643 = vld [vmem:[#allocation2 + $0x68] sm:$0xff]
        %v644 = vld [vmem:[#allocation2 + $0x70] sm:$0xff]
        %v645 = vld [vmem:[#allocation2 + $0x78] sm:$0xff]
        %v646 = vld [vmem:[%s307] sm:$0xff]
        %v647 = vld [vmem:[%s307 + $0x8] sm:$0xff]
        %v648 = vld [vmem:[%s307 + $0x10] sm:$0xff]
        %v649 = vld [vmem:[%s307 + $0x18] sm:$0xff]
        %v650 = vld [vmem:[%s307 + $0x20] sm:$0xff]
        %v651 = vld [vmem:[%s307 + $0x28] sm:$0xff]
        %v652 = vld [vmem:[%s307 + $0x30] sm:$0xff]
        %v653 = vld [vmem:[%s307 + $0x38] sm:$0xff]
        %v654 = vld [vmem:[%s307 + $0x40] sm:$0xff]
        %v655 = vld [vmem:[%s307 + $0x48] sm:$0xff]
        %v656 = vld [vmem:[%s307 + $0x50] sm:$0xff]
        %v657 = vld [vmem:[%s307 + $0x58] sm:$0xff]
        %v658 = vld [vmem:[%s307 + $0x60] sm:$0xff]
        %v659 = vld [vmem:[%s307 + $0x68] sm:$0xff]
        %v660 = vld [vmem:[%s307 + $0x70] sm:$0xff]
        %v661 = vld [vmem:[%s307 + $0x78] sm:$0xff]
        %v662 = vld [vmem:[%s307 + $0x80] sm:$0xff]
        %v663 = vld [vmem:[%s307 + $0x88] sm:$0xff]
        %v664 = vld [vmem:[%s307 + $0x90] sm:$0xff]
        %v665 = vld [vmem:[%s307 + $0x98] sm:$0xff]
        %v666 = vld [vmem:[%s307 + $0xa0] sm:$0xff]
        %v667 = vld [vmem:[%s307 + $0xa8] sm:$0xff]
        %v668 = vld [vmem:[%s307 + $0xb0] sm:$0xff]
        %v669 = vld [vmem:[%s307 + $0xb8] sm:$0xff]
        %v670 = vld [vmem:[%s307 + $0xc0] sm:$0xff]
        %v671 = vld [vmem:[%s307 + $0xc8] sm:$0xff]
        %v672 = vld [vmem:[%s307 + $0xd0] sm:$0xff]
        %v673 = vld [vmem:[%s307 + $0xd8] sm:$0xff]
        %v674 = vld [vmem:[%s307 + $0xe0] sm:$0xff]
        %v675 = vld [vmem:[%s307 + $0xe8] sm:$0xff]
        %v676 = vld [vmem:[%s307 + $0xf0] sm:$0xff]
        %v677 = vld [vmem:[%s307 + $0xf8] sm:$0xff]
        %678 = vmatprep.subr.mxu0 0.0
        %679 = vmatpush1.msra.mxu0 %v661
        %680 = vmatprep.subr.mxu0 0.0
        %681 = vmatpush1.msra.mxu0 %v660
        %682 = vmatprep.subr.mxu0 0.0
        %683 = vmatpush1.msra.mxu0 %v659
        %684 = vmatprep.subr.mxu0 0.0
        %685 = vmatpush1.msra.mxu0 %v658
        %686 = vmatprep.subr.mxu0 0.0
        %687 = vmatpush1.msra.mxu0 %v657
        %688 = vmatprep.subr.mxu0 0.0
        %689 = vmatpush1.msra.mxu0 %v656
        %690 = vmatprep.subr.mxu0 0.0
        %691 = vmatpush1.msra.mxu0 %v655
        %692 = vmatprep.subr.mxu0 0.0
        %693 = vmatpush1.msra.mxu0 %v654
        %694 = vmatprep.subr.mxu0 0.0
        %695 = vmatpush1.msra.mxu0 %v653
        %696 = vmatprep.subr.mxu0 0.0
        %697 = vmatpush1.msra.mxu0 %v652
        %698 = vmatprep.subr.mxu0 0.0
        %699 = vmatpush1.msra.mxu0 %v651
        %700 = vmatprep.subr.mxu0 0.0
        %701 = vmatpush1.msra.mxu0 %v650
        %702 = vmatprep.subr.mxu0 0.0
        %703 = vmatpush1.msra.mxu0 %v649
        %704 = vmatprep.subr.mxu0 0.0
        %705 = vmatpush1.msra.mxu0 %v648
        %706 = vmatprep.subr.mxu0 0.0
        %707 = vmatpush1.msra.mxu0 %v647
        %708 = vmatprep.subr.mxu0 0.0
        %709 = vmatpush1.msra.mxu0 %v646
        %710 = vmatprep.subr.mxu0 0.0
        %711 = vmatpush2.msra.mxu0 %v677
        %712 = vmatprep.subr.mxu0 0.0
        %713 = vmatpush2.msra.mxu0 %v676
        %714 = vmatprep.subr.mxu0 0.0
        %715 = vmatpush2.msra.mxu0 %v675
        %716 = vmatprep.subr.mxu0 0.0
        %717 = vmatpush2.msra.mxu0 %v674
        %718 = vmatprep.subr.mxu0 0.0
        %719 = vmatpush2.msra.mxu0 %v673
        %720 = vmatprep.subr.mxu0 0.0
        %721 = vmatpush2.msra.mxu0 %v672
        %722 = vmatprep.subr.mxu0 0.0
        %723 = vmatpush2.msra.mxu0 %v671
        %724 = vmatprep.subr.mxu0 0.0
        %725 = vmatpush2.msra.mxu0 %v670
        %726 = vmatprep.subr.mxu0 0.0
        %727 = vmatpush2.msra.mxu0 %v669
        %728 = vmatprep.subr.mxu0 0.0
        %729 = vmatpush2.msra.mxu0 %v668
        %730 = vmatprep.subr.mxu0 0.0
        %731 = vmatpush2.msra.mxu0 %v667
        %732 = vmatprep.subr.mxu0 0.0
        %733 = vmatpush2.msra.mxu0 %v666
        %734 = vmatprep.subr.mxu0 0.0
        %735 = vmatpush2.msra.mxu0 %v665
        %736 = vmatprep.subr.mxu0 0.0
        %737 = vmatpush2.msra.mxu0 %v664
        %738 = vmatprep.subr.mxu0 0.0
        %739 = vmatpush2.msra.mxu0 %v663
        %740 = vmatprep.subr.mxu0 0.0
        %741 = vmatpush2.msra.mxu0 %v662
        %742 = vmatprep.mubr.f32.mxu0 %v599
        %743 = vmatmul.mubr.f32.gmra.mxu0 %v598
        %v744 = vpop.f32.mrf.mxu0
        %v745 = vadd.f32 0.0, %v744
        %v746 = vpop.f32.mrf.mxu0
        %747 = vmatprep.mubr.f32.mxu0 %v601
        %748 = vmatmul.mubr.f32.gmra.mxu0 %v600
        %v749 = vpop.f32.mrf.mxu0
        %v750 = vadd.f32 0.0, %v749
        %v751 = vpop.f32.mrf.mxu0
        %752 = vmatprep.mubr.f32.mxu0 %v603
        %753 = vmatmul.mubr.f32.gmra.mxu0 %v602
        %v754 = vpop.f32.mrf.mxu0
        %v755 = vadd.f32 0.0, %v754
        %v756 = vpop.f32.mrf.mxu0
        %757 = vmatprep.mubr.f32.mxu0 %v605
        %758 = vmatmul.mubr.f32.gmra.mxu0 %v604
        %v759 = vpop.f32.mrf.mxu0
        %v760 = vadd.f32 0.0, %v759
        %v761 = vpop.f32.mrf.mxu0
        %762 = vmatprep.mubr.f32.mxu0 %v607
        %763 = vmatmul.mubr.f32.gmra.mxu0 %v606
        %v764 = vpop.f32.mrf.mxu0
        %v765 = vadd.f32 0.0, %v764
        %v766 = vpop.f32.mrf.mxu0
        %767 = vmatprep.mubr.f32.mxu0 %v609
        %768 = vmatmul.mubr.f32.gmra.mxu0 %v608
        %v769 = vpop.f32.mrf.mxu0
        %v770 = vadd.f32 0.0, %v769
        %v771 = vpop.f32.mrf.mxu0
        %772 = vmatprep.mubr.f32.mxu0 %v611
        %773 = vmatmul.mubr.f32.gmra.mxu0 %v610
        %v774 = vpop.f32.mrf.mxu0
        %v775 = vadd.f32 0.0, %v774
        %v776 = vpop.f32.mrf.mxu0
        %777 = vmatprep.mubr.f32.mxu0 %v613
        %778 = vmatmul.mubr.f32.gmra.mxu0 %v612
        %v779 = vpop.f32.mrf.mxu0
        %v780 = vadd.f32 0.0, %v779
        %v781 = vpop.f32.mrf.mxu0
        %782 = vmatprep.mubr.f32.mxu0 %v615
        %783 = vmatmul.mubr.f32.gmra.mxu0 %v614
        %v784 = vpop.f32.mrf.mxu0
        %v785 = vadd.f32 0.0, %v784
        %v786 = vpop.f32.mrf.mxu0
        %787 = vmatprep.mubr.f32.mxu0 %v617
        %788 = vmatmul.mubr.f32.gmra.mxu0 %v616
        %v789 = vpop.f32.mrf.mxu0
        %v790 = vadd.f32 0.0, %v789
        %v791 = vpop.f32.mrf.mxu0
        %792 = vmatprep.mubr.f32.mxu0 %v619
        %793 = vmatmul.mubr.f32.gmra.mxu0 %v618
        %v794 = vpop.f32.mrf.mxu0
        %v795 = vadd.f32 0.0, %v794
        %v796 = vpop.f32.mrf.mxu0
        %797 = vmatprep.mubr.f32.mxu0 %v621
        %798 = vmatmul.mubr.f32.gmra.mxu0 %v620
        %v799 = vpop.f32.mrf.mxu0
        %v800 = vadd.f32 0.0, %v799
        %v801 = vpop.f32.mrf.mxu0
        %802 = vmatprep.mubr.f32.mxu0 %v623
        %803 = vmatmul.mubr.f32.gmra.mxu0 %v622
        %v804 = vpop.f32.mrf.mxu0
        %v805 = vadd.f32 0.0, %v804
        %v806 = vpop.f32.mrf.mxu0
        %807 = vmatprep.mubr.f32.mxu0 %v625
        %808 = vmatmul.mubr.f32.gmra.mxu0 %v624
        %v809 = vpop.f32.mrf.mxu0
        %v810 = vadd.f32 0.0, %v809
        %v811 = vpop.f32.mrf.mxu0
        %812 = vmatprep.mubr.f32.mxu0 %v627
        %813 = vmatmul.mubr.f32.gmra.mxu0 %v626
        %v814 = vpop.f32.mrf.mxu0
        %v815 = vadd.f32 0.0, %v814
        %v816 = vpop.f32.mrf.mxu0
        %817 = vmatprep.mubr.f32.mxu0 %v629
        %818 = vmatmul.mubr.f32.gmra.mxu0 %v628
        %v819 = vpop.f32.mrf.mxu0
        %v820 = vadd.f32 0.0, %v819
        %v821 = vpop.f32.mrf.mxu0
        %822 = vdwg.mxu0
        %v823 = vadd.f32 %v630, %v745
        %v824 = vadd.f32 %v631, %v750
        %v825 = vadd.f32 %v632, %v755
        %v826 = vadd.f32 %v633, %v760
        %v827 = vadd.f32 %v634, %v765
        %v828 = vadd.f32 %v635, %v770
        %v829 = vadd.f32 %v636, %v775
        %v830 = vadd.f32 %v637, %v780
        %v831 = vadd.f32 %v638, %v785
        %v832 = vadd.f32 %v639, %v790
        %v833 = vadd.f32 %v640, %v795
        %v834 = vadd.f32 %v641, %v800
        %v835 = vadd.f32 %v642, %v805
        %v836 = vadd.f32 %v643, %v810
        %v837 = vadd.f32 %v644, %v815
        %v838 = vadd.f32 %v645, %v820
        %839 = vst [vmem:[#allocation2] sm:$0xff] %v823
        %840 = vst [vmem:[#allocation2 + $0x8] sm:$0xff] %v824
        %841 = vst [vmem:[#allocation2 + $0x10] sm:$0xff] %v825
        %842 = vst [vmem:[#allocation2 + $0x18] sm:$0xff] %v826
        %843 = vst [vmem:[#allocation2 + $0x20] sm:$0xff] %v827
        %844 = vst [vmem:[#allocation2 + $0x28] sm:$0xff] %v828
        %845 = vst [vmem:[#allocation2 + $0x30] sm:$0xff] %v829
        %846 = vst [vmem:[#allocation2 + $0x38] sm:$0xff] %v830
        %847 = vst [vmem:[#allocation2 + $0x40] sm:$0xff] %v831
        %848 = vst [vmem:[#allocation2 + $0x48] sm:$0xff] %v832
        %849 = vst [vmem:[#allocation2 + $0x50] sm:$0xff] %v833
        %850 = vst [vmem:[#allocation2 + $0x58] sm:$0xff] %v834
        %851 = vst [vmem:[#allocation2 + $0x60] sm:$0xff] %v835
        %852 = vst [vmem:[#allocation2 + $0x68] sm:$0xff] %v836
        %853 = vst [vmem:[#allocation2 + $0x70] sm:$0xff] %v837
        %854 = vst [vmem:[#allocation2 + $0x78] sm:$0xff] %v838
        %p855 = scmp.eq.s32.totalorder %s32, 1
        // Predicated region
        $region57: #{tpu_custom_call.1} parent=39 // pred_check
          %p856 = pneg %p855
        $region58: #{tpu_custom_call.1} parent=39 // pred_check_branch
          %858 = sbr.rel (%p856) target = $region60
        $region59: #{tpu_custom_call.1} parent=39 // pred_region
          %v859 = vld [vmem:[#allocation2] sm:$0xff]
          %v860 = vld [vmem:[#allocation2 + $0x8] sm:$0xff]
          %v861 = vld [vmem:[#allocation2 + $0x10] sm:$0xff]
          %v862 = vld [vmem:[#allocation2 + $0x18] sm:$0xff]
          %v863 = vld [vmem:[#allocation2 + $0x20] sm:$0xff]
          %v864 = vld [vmem:[#allocation2 + $0x28] sm:$0xff]
          %v865 = vld [vmem:[#allocation2 + $0x30] sm:$0xff]
          %v866 = vld [vmem:[#allocation2 + $0x38] sm:$0xff]
          %v867 = vld [vmem:[#allocation2 + $0x40] sm:$0xff]
          %v868 = vld [vmem:[#allocation2 + $0x48] sm:$0xff]
          %v869 = vld [vmem:[#allocation2 + $0x50] sm:$0xff]
          %v870 = vld [vmem:[#allocation2 + $0x58] sm:$0xff]
          %v871 = vld [vmem:[#allocation2 + $0x60] sm:$0xff]
          %v872 = vld [vmem:[#allocation2 + $0x68] sm:$0xff]
          %v873 = vld [vmem:[#allocation2 + $0x70] sm:$0xff]
          %v874 = vld [vmem:[#allocation2 + $0x78] sm:$0xff]
          %v875 = vld [vmem:[%s5] sm:$0x1]
          %v877 = vlaneseq
          %v878 = vshrl.u32 %v877, 7
          %v879 = vsub.s32 0, %v878
          %v880 = vrot.slane %v875, %v879
          %v882 = vadd.f32 %v859, %v880
          %v883 = vadd.f32 %v860, %v880
          %v884 = vadd.f32 %v861, %v880
          %v885 = vadd.f32 %v862, %v880
          %v886 = vadd.f32 %v863, %v880
          %v887 = vadd.f32 %v864, %v880
          %v888 = vadd.f32 %v865, %v880
          %v889 = vadd.f32 %v866, %v880
          %v890 = vadd.f32 %v867, %v880
          %v891 = vadd.f32 %v868, %v880
          %v892 = vadd.f32 %v869, %v880
          %v893 = vadd.f32 %v870, %v880
          %v894 = vadd.f32 %v871, %v880
          %v895 = vadd.f32 %v872, %v880
          %v896 = vadd.f32 %v873, %v880
          %v897 = vadd.f32 %v874, %v880
          %898 = vst [vmem:[%s347] sm:$0xff] %v882
          %899 = vst [vmem:[%s347 + $0x8] sm:$0xff] %v883
          %900 = vst [vmem:[%s347 + $0x10] sm:$0xff] %v884
          %901 = vst [vmem:[%s347 + $0x18] sm:$0xff] %v885
          %902 = vst [vmem:[%s347 + $0x20] sm:$0xff] %v886
          %903 = vst [vmem:[%s347 + $0x28] sm:$0xff] %v887
          %904 = vst [vmem:[%s347 + $0x30] sm:$0xff] %v888
          %905 = vst [vmem:[%s347 + $0x38] sm:$0xff] %v889
          %906 = vst [vmem:[%s347 + $0x40] sm:$0xff] %v890
          %907 = vst [vmem:[%s347 + $0x48] sm:$0xff] %v891
          %908 = vst [vmem:[%s347 + $0x50] sm:$0xff] %v892
          %909 = vst [vmem:[%s347 + $0x58] sm:$0xff] %v893
          %910 = vst [vmem:[%s347 + $0x60] sm:$0xff] %v894
          %911 = vst [vmem:[%s347 + $0x68] sm:$0xff] %v895
          %912 = vst [vmem:[%s347 + $0x70] sm:$0xff] %v896
          %913 = vst [vmem:[%s347 + $0x78] sm:$0xff] %v897
        $region60: #{tpu_custom_call.1} parent=39 // pred_fallthru
          _
        %s914 = sand.u32 %s172, 1
        %s915 = scalar_lea.sflag [#allocation7], %s914
        %s916 = sand.u32 %s172, 1
        %s917 = smul.addr %s916, 128
        %s918 = scalar_lea.vmem [#allocation11], %s917
        // Predicated region
        $region61: #{tpu_custom_call.1} parent=39 // pred_check
          %p919 = pneg %p182
        $region62: #{tpu_custom_call.1} parent=39 // pred_check_branch
          %921 = sbr.rel (%p919) target = $region64
        $region63: #{tpu_custom_call.1} parent=39 // pred_region
          %s922 = smul.u32 16, %s31
          %s924 = ssub.s32 2048, 2048
          %925 = vsyncadd %s915, %s924
          %s926 = smul.addr %s922, 128
          %s927 = scalar_lea.hbm %s6, %s926
          %s928 = sshll.u32 %s918, 4
          %s929 = int_to_ptr.vmem [resolvable:$true] %s928
          %934 = dma.vmem_to_hbm [thread:$0]  %s929, 2048, %s927, %s915, 128, 128, 8
        $region64: #{tpu_custom_call.1} parent=39 // pred_fallthru
          _
      $region40: #{tpu_custom_call.1} parent=5 // pred_fallthru
        _
      %p935 = scmp.le.s32.totalorder 2, %s22
      // Predicated region
      $region65: #{tpu_custom_call.1} parent=5 // pred_check
        %p936 = pneg %p935
      $region66: #{tpu_custom_call.1} parent=5 // pred_check_branch
        %938 = sbr.rel (%p936) target = $region68
      $region67: #{tpu_custom_call.1} parent=5 // pred_region
        %s939 = ssub.s32 %s22, 2
        // Predicated region
        $region69: #{tpu_custom_call.1} parent=67 // pred_check
          %p940 = pneg %p188
        $region70: #{tpu_custom_call.1} parent=67 // pred_check_branch
          %942 = sbr.rel (%p940) target = $region72
        $region71: #{tpu_custom_call.1} parent=67 // pred_region
          %s943 = sand.u32 %s173, 1
          %s944 = scalar_lea.sflag [#allocation7], %s943
          %s945 = sand.u32 %s173, 1
          %s946 = smul.addr %s945, 128
          %s947 = scalar_lea.vmem [#allocation11], %s946
          %948 = dma.done %s944, 2048
        $region72: #{tpu_custom_call.1} parent=67 // pred_fallthru
          _
      $region68: #{tpu_custom_call.1} parent=5 // pred_fallthru
        _
    $region6: #{tpu_custom_call.1} parent=1 // loop_footer
      %s26 = sadd.s32 1, %s22
    $region7: #{tpu_custom_call.1} parent=1 // loop_footer_branch
      %21 = sbr.rel target = $region3
    $region8: #{tpu_custom_call.1} parent=1 // loop_exit
      _
    %949 = vsyncpa [#allocation6], 1
    %s950 = scalar_lea.sflag [#allocation6], 1
    %951 = vsyncpa %s950, 1
    %952 = vsyncpa [#allocation9], 1
    %s953 = scalar_lea.sflag [#allocation9], 1
    %954 = vsyncpa %s953, 1
    %955 = vsyncpa [#allocation7], 1
    %s956 = scalar_lea.sflag [#allocation7], 1
    %957 = vsyncpa %s956, 1

</llo_original>
